<compile_context>
chip_gen: v7x
topology: tpu7x:2x2x1
jax: 0.10.0
libtpu: 0.0.40
codegen_flags: <defaults>
</compile_context>

<pallas_src>
import functools

import jax
import jax.numpy as jnp
from jax.experimental import pallas as pl
from jax.experimental.pallas import tpu as pltpu

HIDDEN = (256, 128, 64, 32)
BN_EPS = 1e-5
LANE = 128


def _mlp_kernel(x_ref, w1_ref, w2_ref, w3_ref, w4_ref, w5_ref, b_ref, o_ref):
    """fc1..fc4 (BN folded into W, +ReLU) and fc5 (+bias); weights VMEM-resident."""
    b = b_ref[...]                                   # (8, 256) f32 packed biases
    wdt = w1_ref.dtype                               # bf16

    def dense(h, w_ref):
        return jnp.dot(h.astype(wdt), w_ref[...],
                       preferred_element_type=jnp.float32)

    h = jnp.maximum(dense(x_ref[...], w1_ref) + b[0:1, :], 0.0)      # (bt, 256)
    h = jnp.maximum(dense(h, w2_ref) + b[1:2, :LANE], 0.0)           # (bt, 128)
    h = jnp.maximum(dense(h, w3_ref) + b[2:3, :LANE], 0.0)           # (bt, 128) [64 real]
    h = jnp.maximum(dense(h, w4_ref) + b[3:4, :LANE], 0.0)           # (bt, 128) [32 real]
    o_ref[...] = dense(h, w5_ref) + b[4:5, :LANE]                    # (bt, 128) [out real]


def prepare_params(params, weight_dtype=jnp.bfloat16):
    """One-time prep: fold BN into weights, transpose, pad to lane width, cast.

    Done once outside the per-call jitted forward so XLA does not re-emit the
    transposes/folds in HBM on every call.
    """
    (w1, g1, b1, m1, v1,
     w2, g2, b2, m2, v2,
     w3, g3, b3, m3, v3,
     w4, g4, b4, m4, v4,
     w5, bias5) = params

    def fold(w, g, b, m, v):
        scale = g / jnp.sqrt(v + BN_EPS)
        wt = w.T * scale[None, :]          # (in, out); BN scale folded into columns
        shift = b - m * scale              # per-feature bias
        return wt, shift

    w1f, s1 = fold(w1, g1, b1, m1, v1)     # (in, 256)
    w2f, s2 = fold(w2, g2, b2, m2, v2)     # (256, 128)
    w3f, s3 = fold(w3, g3, b3, m3, v3)     # (128, 64)
    w4f, s4 = fold(w4, g4, b4, m4, v4)     # (64, 32)
    w5t = w5.T                             # (32, out)

    out_dim = bias5.shape[0]
    assert out_dim <= LANE, "kernel assumes output_size <= 128"

    def pad_to(w, rows, cols):
        return jnp.pad(w, ((0, rows - w.shape[0]), (0, cols - w.shape[1])))

    # Zero-padding keeps the math exact: padded weight cols/rows are 0 and
    # ReLU(0) = 0, so padded feature lanes never contribute.
    w3p = pad_to(w3f, LANE, LANE)          # (128, 128)
    w4p = pad_to(w4f, LANE, LANE)          # (128, 128)
    w5p = pad_to(w5t, LANE, LANE)          # (128, 128)

    # Pack the five per-layer biases into one (8, 256) f32 block.
    bias = jnp.zeros((8, 256), jnp.float32)
    bias = bias.at[0, :256].set(s1)
    bias = bias.at[1, :128].set(s2)
    bias = bias.at[2, :64].set(s3)
    bias = bias.at[3, :32].set(s4)
    bias = bias.at[4, :out_dim].set(bias5)

    weights = tuple(w.astype(weight_dtype) for w in (w1f, w2f, w3p, w4p, w5p))
    return weights + (bias,), out_dim


def _round_up(n, m):
    return ((n + m - 1) // m) * m


@functools.partial(jax.jit, static_argnames=("out_dim", "block_b"))
def regression_net_forward(x, prepped, *, out_dim, block_b=1024):
    """x: (B, input_size) f32 -> (B, out_dim) f32."""
    w1, w2, w3, w4, w5, bias = prepped
    B, in_dim = x.shape

    # Large batch tile (multiple of 256) for MXU fill; small batches collapse
    # to a single padded tile. VMEM budget at bt=1024: ~5 MiB incl. double
    # buffering -> safe on v5e/v6e (128 MiB) and v7x (64 MiB).
    bt = block_b if B >= block_b else max(8, _round_up(B, 8))
    Bp = _round_up(B, bt)
    if Bp != B:
        x = jnp.pad(x, ((0, Bp - B), (0, 0)))

    def resident(shape):
        # Constant block index -> fetched once, stays in VMEM across the grid.
        return pl.BlockSpec(shape, lambda i: (0,) * len(shape))

    out_p = pl.pallas_call(
        _mlp_kernel,
        out_shape=jax.ShapeDtypeStruct((Bp, LANE), jnp.float32),
        grid=(Bp // bt,),
        in_specs=[
            pl.BlockSpec((bt, in_dim), lambda i: (i, 0)),   # x: batch-tiled
            resident(w1.shape), resident(w2.shape), resident(w3.shape),
            resident(w4.shape), resident(w5.shape),
            resident(bias.shape),
        ],
        out_specs=pl.BlockSpec((bt, LANE), lambda i: (i, 0)),
        compiler_params=pltpu.CompilerParams(
            dimension_semantics=("parallel",),    # split batch across TCs (v7x)
            vmem_limit_bytes=32 << 20,
        ),
    )(x, w1, w2, w3, w4, w5, bias)

    return out_p[:B, :out_dim]


def init_params(key, input_size, output_size):
    """Deterministic synthetic parameters matching RegressionNet.__init__."""
    dims_in = (input_size,) + HIDDEN
    dims_out = HIDDEN + (output_size,)
    keys = jax.random.split(key, 32)
    ki = iter(range(32))

    params = []
    # fc1..fc4 (bias=False), each followed by BatchNorm1d params.
    for li in range(4):
        fan_in, fan_out = dims_in[li], dims_out[li]
        w = jax.random.normal(keys[next(ki)], (fan_out, fan_in), jnp.float32) * (
            1.0 / jnp.sqrt(fan_in))
        gamma = 1.0 + 0.1 * jax.random.normal(keys[next(ki)], (fan_out,), jnp.float32)
        beta = 0.1 * jax.random.normal(keys[next(ki)], (fan_out,), jnp.float32)
        rmean = 0.05 * jax.random.normal(keys[next(ki)], (fan_out,), jnp.float32)
        rvar = 0.5 + jnp.abs(jax.random.normal(keys[next(ki)], (fan_out,), jnp.float32))
        params += [w, gamma, beta, rmean, rvar]

    # fc5 (with bias)
    fan_in, fan_out = dims_in[4], dims_out[4]
    w5 = jax.random.normal(keys[next(ki)], (fan_out, fan_in), jnp.float32) * (
        1.0 / jnp.sqrt(fan_in))
    bias5 = 0.1 * jax.random.normal(keys[next(ki)], (fan_out,), jnp.float32)
    params += [w5, bias5]
    return tuple(params)


def reference_forward(x, params):
    """Pure-JAX f32 reference with the original module math (eval-mode BN)."""
    (w1, g1, b1, m1, v1,
     w2, g2, b2, m2, v2,
     w3, g3, b3, m3, v3,
     w4, g4, b4, m4, v4,
     w5, bias5) = params

    def layer(h, w, g, b, m, v):
        h = h @ w.T
        h = (h - m) / jnp.sqrt(v + BN_EPS) * g + b
        return jnp.maximum(h, 0.0)

    h = layer(x, w1, g1, b1, m1, v1)
    h = layer(h, w2, g2, b2, m2, v2)
    h = layer(h, w3, g3, b3, m3, v3)
    h = layer(h, w4, g4, b4, m4, v4)
    return h @ w5.T + bias5


def reference_forward_prepared(x, prepped, out_dim):
    """Pure-JAX forward on the SAME prepared (folded/padded/bf16) params."""
    w1, w2, w3, w4, w5, b = prepped
    wdt = w1.dtype

    def dense(h, w):
        return jnp.dot(h.astype(wdt), w, preferred_element_type=jnp.float32)

    h = jnp.maximum(dense(x, w1) + b[0:1, :], 0.0)
    h = jnp.maximum(dense(h, w2) + b[1:2, :LANE], 0.0)
    h = jnp.maximum(dense(h, w3) + b[2:3, :LANE], 0.0)
    h = jnp.maximum(dense(h, w4) + b[3:4, :LANE], 0.0)
    out = dense(h, w5) + b[4:5, :LANE]
    return out[:, :out_dim]


if __name__ == "__main__":
    INPUT_SIZE = 32
    OUTPUT_SIZE = 8
    BATCH = 16

    key = jax.random.PRNGKey(0)
    pkey, xkey, xkey2 = jax.random.split(key, 3)
    params = init_params(pkey, INPUT_SIZE, OUTPUT_SIZE)
    prepped, out_dim = prepare_params(params)   # one-time prep (fold/pad/cast)

    x = jax.random.normal(xkey, (BATCH, INPUT_SIZE), jnp.float32)
    out = jax.block_until_ready(regression_net_forward(x, prepped, out_dim=out_dim))
    assert out.shape == (BATCH, OUTPUT_SIZE)

    # Tight check: kernel vs pure-JAX forward on the same prepared params.
    ref_p = reference_forward_prepared(x, prepped, out_dim)
    assert jnp.allclose(out, ref_p, atol=2e-3, rtol=2e-3), float(
        jnp.max(jnp.abs(out - ref_p)))

    # Semantic check vs the original f32 module math (looser: bf16 weights).
    ref = reference_forward(x, params)
    assert jnp.allclose(out, ref, atol=1e-1, rtol=1e-1), float(
        jnp.max(jnp.abs(out - ref)))

    # Exercise the multi-tile grid path (batch padded to a tile multiple).
    x2 = jax.random.normal(xkey2, (40, INPUT_SIZE), jnp.float32)
    out2 = jax.block_until_ready(
        regression_net_forward(x2, prepped, out_dim=out_dim, block_b=16))
    assert out2.shape == (40, OUTPUT_SIZE)
    ref2 = reference_forward_prepared(x2, prepped, out_dim)
    assert jnp.allclose(out2, ref2, atol=2e-3, rtol=2e-3)

    print("KERNEL_OK")
</pallas_src>

<mosaic_0001>
module attributes {stable_mosaic.version = 11 : i64} {
  func.func @_mlp_kernel(%arg0: i32, %arg1: memref<16x32xf32, #tpu.memory_space<vmem>>, %arg2: memref<32x256xbf16, #tpu.memory_space<vmem>>, %arg3: memref<256x128xbf16, #tpu.memory_space<vmem>>, %arg4: memref<128x128xbf16, #tpu.memory_space<vmem>>, %arg5: memref<128x128xbf16, #tpu.memory_space<vmem>>, %arg6: memref<128x128xbf16, #tpu.memory_space<vmem>>, %arg7: memref<8x256xf32, #tpu.memory_space<vmem>>, %arg8: memref<16x128xf32, #tpu.memory_space<vmem>>) attributes {dimension_semantics = [#tpu.dimension_semantics<parallel>], iteration_bounds = array<i64: 1>, scalar_prefetch = 0 : i64, scratch_operands = 0 : i64, tpu.core_type = #tpu.core_type<tc>, window_params = [{transform_indices = @transform_0, window_bounds = array<i64: 16, 32>}, {pipeline_mode = #tpu.pipeline_mode<synchronous>, transform_indices = @transform_1, window_bounds = array<i64: 32, 256>}, {pipeline_mode = #tpu.pipeline_mode<synchronous>, transform_indices = @transform_2, window_bounds = array<i64: 256, 128>}, {pipeline_mode = #tpu.pipeline_mode<synchronous>, transform_indices = @transform_3, window_bounds = array<i64: 128, 128>}, {pipeline_mode = #tpu.pipeline_mode<synchronous>, transform_indices = @transform_4, window_bounds = array<i64: 128, 128>}, {pipeline_mode = #tpu.pipeline_mode<synchronous>, transform_indices = @transform_5, window_bounds = array<i64: 128, 128>}, {pipeline_mode = #tpu.pipeline_mode<synchronous>, transform_indices = @transform_6, window_bounds = array<i64: 8, 256>}, {transform_indices = @transform_7, window_bounds = array<i64: 16, 128>}]} {
    %c0 = arith.constant 0 : index
    %c0_0 = arith.constant 0 : index
    %0 = vector.load %arg7[%c0, %c0_0] : memref<8x256xf32, #tpu.memory_space<vmem>>, vector<8x256xf32>
    %c0_1 = arith.constant 0 : index
    %c0_2 = arith.constant 0 : index
    %1 = vector.load %arg1[%c0_1, %c0_2] : memref<16x32xf32, #tpu.memory_space<vmem>>, vector<16x32xf32>
    %2 = arith.truncf %1 : vector<16x32xf32> to vector<16x32xbf16>
    %c0_3 = arith.constant 0 : index
    %c0_4 = arith.constant 0 : index
    %3 = vector.load %arg2[%c0_3, %c0_4] : memref<32x256xbf16, #tpu.memory_space<vmem>>, vector<32x256xbf16>
    %cst = arith.constant dense<0.000000e+00> : vector<16x256xf32>
    %4 = tpu.matmul %2, %3, %cst {dimension_numbers = #tpu.dot_dimension_numbers<[1], [0], [0], [1], [0, 0, 1, 1], [], []>} : vector<16x32xbf16>, vector<32x256xbf16>, vector<16x256xf32> -> vector<16x256xf32>
    %5 = vector.extract_strided_slice %0 {offsets = [0, 0], sizes = [1, 256], strides = [1, 1]} : vector<8x256xf32> to vector<1x256xf32>
    %6 = vector.broadcast %5 : vector<1x256xf32> to vector<16x256xf32>
    %7 = arith.addf %4, %6 : vector<16x256xf32>
    %cst_5 = arith.constant 0.000000e+00 : f32
    %8 = vector.broadcast %cst_5 : f32 to vector<16x256xf32>
    %9 = arith.maximumf %7, %8 : vector<16x256xf32>
    %10 = arith.truncf %9 : vector<16x256xf32> to vector<16x256xbf16>
    %c0_6 = arith.constant 0 : index
    %c0_7 = arith.constant 0 : index
    %11 = vector.load %arg3[%c0_6, %c0_7] : memref<256x128xbf16, #tpu.memory_space<vmem>>, vector<256x128xbf16>
    %cst_8 = arith.constant dense<0.000000e+00> : vector<16x128xf32>
    %12 = tpu.matmul %10, %11, %cst_8 {dimension_numbers = #tpu.dot_dimension_numbers<[1], [0], [0], [1], [0, 0, 1, 1], [], []>} : vector<16x256xbf16>, vector<256x128xbf16>, vector<16x128xf32> -> vector<16x128xf32>
    %13 = vector.extract_strided_slice %0 {offsets = [1, 0], sizes = [1, 128], strides = [1, 1]} : vector<8x256xf32> to vector<1x128xf32>
    %14 = vector.broadcast %13 : vector<1x128xf32> to vector<16x128xf32>
    %15 = arith.addf %12, %14 : vector<16x128xf32>
    %cst_9 = arith.constant 0.000000e+00 : f32
    %16 = vector.broadcast %cst_9 : f32 to vector<16x128xf32>
    %17 = arith.maximumf %15, %16 : vector<16x128xf32>
    %18 = arith.truncf %17 : vector<16x128xf32> to vector<16x128xbf16>
    %c0_10 = arith.constant 0 : index
    %c0_11 = arith.constant 0 : index
    %19 = vector.load %arg4[%c0_10, %c0_11] : memref<128x128xbf16, #tpu.memory_space<vmem>>, vector<128x128xbf16>
    %cst_12 = arith.constant dense<0.000000e+00> : vector<16x128xf32>
    %20 = tpu.matmul %18, %19, %cst_12 {dimension_numbers = #tpu.dot_dimension_numbers<[1], [0], [0], [1], [0, 0, 1, 1], [], []>} : vector<16x128xbf16>, vector<128x128xbf16>, vector<16x128xf32> -> vector<16x128xf32>
    %21 = vector.extract_strided_slice %0 {offsets = [2, 0], sizes = [1, 128], strides = [1, 1]} : vector<8x256xf32> to vector<1x128xf32>
    %22 = vector.broadcast %21 : vector<1x128xf32> to vector<16x128xf32>
    %23 = arith.addf %20, %22 : vector<16x128xf32>
    %cst_13 = arith.constant 0.000000e+00 : f32
    %24 = vector.broadcast %cst_13 : f32 to vector<16x128xf32>
    %25 = arith.maximumf %23, %24 : vector<16x128xf32>
    %26 = arith.truncf %25 : vector<16x128xf32> to vector<16x128xbf16>
    %c0_14 = arith.constant 0 : index
    %c0_15 = arith.constant 0 : index
    %27 = vector.load %arg5[%c0_14, %c0_15] : memref<128x128xbf16, #tpu.memory_space<vmem>>, vector<128x128xbf16>
    %cst_16 = arith.constant dense<0.000000e+00> : vector<16x128xf32>
    %28 = tpu.matmul %26, %27, %cst_16 {dimension_numbers = #tpu.dot_dimension_numbers<[1], [0], [0], [1], [0, 0, 1, 1], [], []>} : vector<16x128xbf16>, vector<128x128xbf16>, vector<16x128xf32> -> vector<16x128xf32>
    %29 = vector.extract_strided_slice %0 {offsets = [3, 0], sizes = [1, 128], strides = [1, 1]} : vector<8x256xf32> to vector<1x128xf32>
    %30 = vector.broadcast %29 : vector<1x128xf32> to vector<16x128xf32>
    %31 = arith.addf %28, %30 : vector<16x128xf32>
    %cst_17 = arith.constant 0.000000e+00 : f32
    %32 = vector.broadcast %cst_17 : f32 to vector<16x128xf32>
    %33 = arith.maximumf %31, %32 : vector<16x128xf32>
    %34 = arith.truncf %33 : vector<16x128xf32> to vector<16x128xbf16>
    %c0_18 = arith.constant 0 : index
    %c0_19 = arith.constant 0 : index
    %35 = vector.load %arg6[%c0_18, %c0_19] : memref<128x128xbf16, #tpu.memory_space<vmem>>, vector<128x128xbf16>
    %cst_20 = arith.constant dense<0.000000e+00> : vector<16x128xf32>
    %36 = tpu.matmul %34, %35, %cst_20 {dimension_numbers = #tpu.dot_dimension_numbers<[1], [0], [0], [1], [0, 0, 1, 1], [], []>} : vector<16x128xbf16>, vector<128x128xbf16>, vector<16x128xf32> -> vector<16x128xf32>
    %37 = vector.extract_strided_slice %0 {offsets = [4, 0], sizes = [1, 128], strides = [1, 1]} : vector<8x256xf32> to vector<1x128xf32>
    %38 = vector.broadcast %37 : vector<1x128xf32> to vector<16x128xf32>
    %39 = arith.addf %36, %38 : vector<16x128xf32>
    %c0_21 = arith.constant 0 : index
    %c0_22 = arith.constant 0 : index
    %40 = vector.load %arg8[%c0_21, %c0_22] : memref<16x128xf32, #tpu.memory_space<vmem>>, vector<16x128xf32>
    tpu.vector_store %arg8[%c0_21, %c0_22], %39 {strides = array<i32>} : memref<16x128xf32, #tpu.memory_space<vmem>>, vector<16x128xf32>,
    return
  }
  func.func @transform_0(%arg0: i32) -> (i32, i32) {
    %c0_i32 = arith.constant 0 : i32
    %c0_i32_0 = arith.constant 0 : i32
    return %arg0, %c0_i32 : i32, i32
  }
  func.func @transform_1(%arg0: i32) -> (i32, i32) {
    %c0_i32 = arith.constant 0 : i32
    %c0_i32_0 = arith.constant 0 : i32
    %c0_i32_1 = arith.constant 0 : i32
    return %c0_i32, %c0_i32_0 : i32, i32
  }
  func.func @transform_2(%arg0: i32) -> (i32, i32) {
    %c0_i32 = arith.constant 0 : i32
    %c0_i32_0 = arith.constant 0 : i32
    %c0_i32_1 = arith.constant 0 : i32
    return %c0_i32, %c0_i32_0 : i32, i32
  }
  func.func @transform_3(%arg0: i32) -> (i32, i32) {
    %c0_i32 = arith.constant 0 : i32
    %c0_i32_0 = arith.constant 0 : i32
    %c0_i32_1 = arith.constant 0 : i32
    return %c0_i32, %c0_i32_0 : i32, i32
  }
  func.func @transform_4(%arg0: i32) -> (i32, i32) {
    %c0_i32 = arith.constant 0 : i32
    %c0_i32_0 = arith.constant 0 : i32
    %c0_i32_1 = arith.constant 0 : i32
    return %c0_i32, %c0_i32_0 : i32, i32
  }
  func.func @transform_5(%arg0: i32) -> (i32, i32) {
    %c0_i32 = arith.constant 0 : i32
    %c0_i32_0 = arith.constant 0 : i32
    %c0_i32_1 = arith.constant 0 : i32
    return %c0_i32, %c0_i32_0 : i32, i32
  }
  func.func @transform_6(%arg0: i32) -> (i32, i32) {
    %c0_i32 = arith.constant 0 : i32
    %c0_i32_0 = arith.constant 0 : i32
    %c0_i32_1 = arith.constant 0 : i32
    return %c0_i32, %c0_i32_0 : i32, i32
  }
  func.func @transform_7(%arg0: i32) -> (i32, i32) {
    %c0_i32 = arith.constant 0 : i32
    %c0_i32_0 = arith.constant 0 : i32
    return %arg0, %c0_i32 : i32, i32
  }
}

</mosaic_0001>

<llo_original>
// kernel: regression_net_forward.1
$region0: #{regression_net_forward.1}
  #allocation0 [shape = 'u32[]', space=smem, size = 0x4, offset = 0x4, fixed_abs, tag = 'smem constant byte address 0x4 - core index']
  #allocation1 [shape = 'u32[144,128]{1,0:T(1,128)}', space=vmem, size = 0x12000, scoped, tag = 'internal scratch']
  %s0 = inlined_call_operand.hbm [shape: f32[16,32], index: 0, kind: input, shape index: {}]
  %s1 = inlined_call_operand.hbm [shape: bf16[32,256], index: 1, kind: input, shape index: {}]
  %s2 = inlined_call_operand.hbm [shape: bf16[256,128], index: 2, kind: input, shape index: {}]
  %s3 = inlined_call_operand.hbm [shape: bf16[128,128], index: 3, kind: input, shape index: {}]
  %s4 = inlined_call_operand.hbm [shape: bf16[128,128], index: 4, kind: input, shape index: {}]
  %s5 = inlined_call_operand.hbm [shape: bf16[128,128], index: 5, kind: input, shape index: {}]
  %s6 = inlined_call_operand.vmem [shape: f32[8,256], index: 6, kind: input, shape index: {}]
  %s7 = inlined_call_operand.vmem [shape: f32[16,128], index: 7, kind: output, shape index: {}]
  %s8 = sld [smem:[#allocation0]]
  $region62: #{regression_net_forward.1} parent=0
    _
  %s10 = ssub.s32 1, %s8
  %s11 = scalar_select 0, %s10, %s8
  $region1: #{regression_net_forward.1} parent=0
    #allocation2 [shape = 'u8[8192]{0}', space=vmem, size = 0x2000, scoped, tag = 'input window, operand 0, single buffered']
    #allocation3 [shape = 's32[1]{0}', space=sflag, size = 0x4, scoped, tag = 'scoped memory for regression_net_forward.1']
    #allocation4 [shape = 'u8[16384]{0}', space=vmem, size = 0x4000, scoped, tag = 'input window, operand 1, single buffered']
    #allocation5 [shape = 's32[1]{0}', space=sflag, size = 0x4, scoped, tag = 'scoped memory for regression_net_forward.1']
    #allocation6 [shape = 'u8[65536]{0}', space=vmem, size = 0x10000, scoped, tag = 'input window, operand 2, single buffered']
    #allocation7 [shape = 'u8[32768]{0}', space=vmem, size = 0x8000, scoped, tag = 'input window, operand 3, single buffered']
    #allocation8 [shape = 's32[1]{0}', space=sflag, size = 0x4, scoped, tag = 'scoped memory for regression_net_forward.1']
    #allocation9 [shape = 'u8[32768]{0}', space=vmem, size = 0x8000, scoped, tag = 'input window, operand 4, single buffered']
    #allocation10 [shape = 'u8[32768]{0}', space=vmem, size = 0x8000, scoped, tag = 'input window, operand 5, single buffered']
    #allocation11 [shape = 's32[1]{0}', space=sflag, size = 0x4, scoped, tag = 'scoped memory for regression_net_forward.1']
    %12 = vsyncpa [#allocation3], 0
    %13 = vsyncpa [#allocation5], 0
    %14 = vsyncpa [#allocation8], 0
    %15 = vsyncpa [#allocation11], 0
    // Predicated region
    $region2: #{regression_net_forward.1} parent=1 // pred_check
      _
    $region3: #{regression_net_forward.1} parent=1 // pred_check_branch
      %17 = sbr.rel (0) target = $region5
    $region4: #{regression_net_forward.1} parent=1 // pred_region
      %s19 = ssub.s32 256, 256
      %20 = vsyncadd [#allocation3], %s19
      %s21 = sshll.u32 [#allocation2], 4
      %s22 = int_to_ptr.vmem [resolvable:$true] %s21
      %27 = dma.hbm_to_vmem [thread:$0]  %s0, 256, %s22, [#allocation3], 128, 128, 8
    $region5: #{regression_net_forward.1} parent=1 // pred_fallthru
      _
    // Predicated region
    $region6: #{regression_net_forward.1} parent=1 // pred_check
      _
    $region7: #{regression_net_forward.1} parent=1 // pred_check_branch
      %29 = sbr.rel (0) target = $region9
    $region8: #{regression_net_forward.1} parent=1 // pred_region
      %s31 = ssub.s32 512, 512
      %32 = vsyncadd [#allocation5], %s31
      %s33 = sshll.u32 [#allocation4], 4
      %s34 = int_to_ptr.vmem [resolvable:$true] %s33
      %39 = dma.hbm_to_vmem [thread:$0]  %s1, 512, %s34, [#allocation5], 128, 128, 8
    $region9: #{regression_net_forward.1} parent=1 // pred_fallthru
      _
    // Predicated region
    $region10: #{regression_net_forward.1} parent=1 // pred_check
      _
    $region11: #{regression_net_forward.1} parent=1 // pred_check_branch
      %41 = sbr.rel (0) target = $region13
    $region12: #{regression_net_forward.1} parent=1 // pred_region
      %s43 = ssub.s32 2048, 2048
      %44 = vsyncadd [#allocation5], %s43
      %s45 = sshll.u32 [#allocation6], 4
      %s46 = int_to_ptr.vmem [resolvable:$true] %s45
      %51 = dma.hbm_to_vmem [thread:$0]  %s2, 2048, %s46, [#allocation5], 64, 64, 4
    $region13: #{regression_net_forward.1} parent=1 // pred_fallthru
      _
    // Predicated region
    $region14: #{regression_net_forward.1} parent=1 // pred_check
      _
    $region15: #{regression_net_forward.1} parent=1 // pred_check_branch
      %53 = sbr.rel (0) target = $region17
    $region16: #{regression_net_forward.1} parent=1 // pred_region
      %s55 = ssub.s32 1024, 1024
      %56 = vsyncadd [#allocation8], %s55
      %s57 = sshll.u32 [#allocation7], 4
      %s58 = int_to_ptr.vmem [resolvable:$true] %s57
      %63 = dma.hbm_to_vmem [thread:$0]  %s3, 1024, %s58, [#allocation8], 64, 64, 4
    $region17: #{regression_net_forward.1} parent=1 // pred_fallthru
      _
    // Predicated region
    $region18: #{regression_net_forward.1} parent=1 // pred_check
      _
    $region19: #{regression_net_forward.1} parent=1 // pred_check_branch
      %65 = sbr.rel (0) target = $region21
    $region20: #{regression_net_forward.1} parent=1 // pred_region
      %s67 = ssub.s32 1024, 1024
      %68 = vsyncadd [#allocation8], %s67
      %s69 = sshll.u32 [#allocation9], 4
      %s70 = int_to_ptr.vmem [resolvable:$true] %s69
      %75 = dma.hbm_to_vmem [thread:$0]  %s4, 1024, %s70, [#allocation8], 64, 64, 4
    $region21: #{regression_net_forward.1} parent=1 // pred_fallthru
      _
    // Predicated region
    $region22: #{regression_net_forward.1} parent=1 // pred_check
      _
    $region23: #{regression_net_forward.1} parent=1 // pred_check_branch
      %77 = sbr.rel (0) target = $region25
    $region24: #{regression_net_forward.1} parent=1 // pred_region
      %s79 = ssub.s32 1024, 1024
      %80 = vsyncadd [#allocation11], %s79
      %s81 = sshll.u32 [#allocation10], 4
      %s82 = int_to_ptr.vmem [resolvable:$true] %s81
      %87 = dma.hbm_to_vmem [thread:$0]  %s5, 1024, %s82, [#allocation11], 64, 64, 4
    $region25: #{regression_net_forward.1} parent=1 // pred_fallthru
      _
    // Predicated region
    $region26: #{regression_net_forward.1} parent=1 // pred_check
      _
    $region27: #{regression_net_forward.1} parent=1 // pred_check_branch
      %89 = sbr.rel (0) target = $region29
    $region28: #{regression_net_forward.1} parent=1 // pred_region
      _
    $region29: #{regression_net_forward.1} parent=1 // pred_fallthru
      _
    // Predicated region
    $region30: #{regression_net_forward.1} parent=1 // pred_check
      _
    $region31: #{regression_net_forward.1} parent=1 // pred_check_branch
      %91 = sbr.rel (0) target = $region33
    $region32: #{regression_net_forward.1} parent=1 // pred_region
      %92 = dma.done [#allocation3], 256
    $region33: #{regression_net_forward.1} parent=1 // pred_fallthru
      _
    // Predicated region
    $region34: #{regression_net_forward.1} parent=1 // pred_check
      _
    $region35: #{regression_net_forward.1} parent=1 // pred_check_branch
      %94 = sbr.rel (0) target = $region37
    $region36: #{regression_net_forward.1} parent=1 // pred_region
      %95 = dma.done [#allocation5], 512
    $region37: #{regression_net_forward.1} parent=1 // pred_fallthru
      _
    // Predicated region
    $region38: #{regression_net_forward.1} parent=1 // pred_check
      _
    $region39: #{regression_net_forward.1} parent=1 // pred_check_branch
      %97 = sbr.rel (0) target = $region41
    $region40: #{regression_net_forward.1} parent=1 // pred_region
      %98 = dma.done [#allocation5], 2048
    $region41: #{regression_net_forward.1} parent=1 // pred_fallthru
      _
    // Predicated region
    $region42: #{regression_net_forward.1} parent=1 // pred_check
      _
    $region43: #{regression_net_forward.1} parent=1 // pred_check_branch
      %100 = sbr.rel (0) target = $region45
    $region44: #{regression_net_forward.1} parent=1 // pred_region
      %101 = dma.done [#allocation8], 1024
    $region45: #{regression_net_forward.1} parent=1 // pred_fallthru
      _
    // Predicated region
    $region46: #{regression_net_forward.1} parent=1 // pred_check
      _
    $region47: #{regression_net_forward.1} parent=1 // pred_check_branch
      %103 = sbr.rel (0) target = $region49
    $region48: #{regression_net_forward.1} parent=1 // pred_region
      %104 = dma.done [#allocation8], 1024
    $region49: #{regression_net_forward.1} parent=1 // pred_fallthru
      _
    // Predicated region
    $region50: #{regression_net_forward.1} parent=1 // pred_check
      _
    $region51: #{regression_net_forward.1} parent=1 // pred_check_branch
      %106 = sbr.rel (0) target = $region53
    $region52: #{regression_net_forward.1} parent=1 // pred_region
      %107 = dma.done [#allocation11], 1024
    $region53: #{regression_net_forward.1} parent=1 // pred_fallthru
      _
    %v109 = vld [vmem:[%s6] sm:$0xff]
    %v110 = vld [vmem:[%s6 + $0x8] sm:$0xff]
    %v111 = vld [vmem:[#allocation2] sm:$0xff]
    %v112 = vld [vmem:[#allocation2 + $0x8] sm:$0xff]
    %v113 = vpack.c.bf16 %v112, %v111
    %v114 = vld [vmem:[#allocation4] sm:$0xff]
    %v115 = vld [vmem:[#allocation4 + $0x8] sm:$0xff]
    %v116 = vld [vmem:[#allocation4 + $0x10] sm:$0xff]
    %v117 = vld [vmem:[#allocation4 + $0x18] sm:$0xff]
    %v118 = vlaneseq
    %v119 = vshrl.u32 %v118, 7
    %v120 = vsub.s32 0, %v119
    %v121 = vrot.slane %v109, %v120
    %v122 = vlaneseq
    %v123 = vshrl.u32 %v122, 7
    %v124 = vsub.s32 0, %v123
    %v125 = vrot.slane %v110, %v124
    %v130 = vunpack.c.l.b16 %v114
    %v131 = vunpack.c.h.b16 %v114
    %v132 = vunpack.c.l.b16 %v115
    %v133 = vunpack.c.h.b16 %v115
    %v134 = vunpack.c.l.b16 %v116
    %v135 = vunpack.c.h.b16 %v116
    %v136 = vunpack.c.l.b16 %v117
    %v137 = vunpack.c.h.b16 %v117
    %v138 = vpack.c.b16 %v132, %v130
    %v139 = vpack.c.b16 %v133, %v131
    %v140 = vpack.c.b16 %v136, %v134
    %v141 = vpack.c.b16 %v137, %v135
    %vm146 = vcmask 261120
    %v148 = vsel %vm146, %v113, 0
    %150 = vmatprep.subr.bf16.mxu0 %v139
    %151 = vmatpush1.bf16.msra.mxu0 %v138
    %152 = vmatprep.subr.bf16.mxu0 %v141
    %153 = vmatpush1.bf16.msra.mxu0 %v140
    %154 = vmatprep.subr.bf16.mxu0 0
    %155 = vmatpush1.bf16.msra.mxu0 0
    %156 = vmatprep.subr.bf16.mxu0 0
    %157 = vmatpush1.bf16.msra.mxu0 0
    %158 = vmatprep.subr.bf16.mxu0 0
    %159 = vmatpush1.bf16.msra.mxu0 0
    %160 = vmatprep.subr.bf16.mxu0 0
    %161 = vmatpush1.bf16.msra.mxu0 0
    %162 = vmatprep.subr.bf16.mxu0 0
    %163 = vmatpush1.bf16.msra.mxu0 0
    %164 = vmatprep.subr.bf16.mxu0 0
    %165 = vmatpush1.bf16.msra.mxu0 0
    %166 = vmatprep.subr.bf16.mxu0 0
    %167 = vmatpush1.bf16.msra.mxu0 0
    %168 = vmatprep.subr.bf16.mxu0 0
    %169 = vmatpush1.bf16.msra.mxu0 0
    %170 = vmatprep.subr.bf16.mxu0 0
    %171 = vmatpush1.bf16.msra.mxu0 0
    %172 = vmatprep.subr.bf16.mxu0 0
    %173 = vmatpush1.bf16.msra.mxu0 0
    %174 = vmatprep.subr.bf16.mxu0 0
    %175 = vmatpush1.bf16.msra.mxu0 0
    %176 = vmatprep.subr.bf16.mxu0 0
    %177 = vmatpush1.bf16.msra.mxu0 0
    %178 = vmatprep.subr.bf16.mxu0 0
    %179 = vmatpush1.bf16.msra.mxu0 0
    %180 = vmatprep.subr.bf16.mxu0 0
    %181 = vmatpush1.bf16.msra.mxu0 0
    %182 = vmatprep.mubr.bf16.mxu0 0
    %183 = vmatmul.mubr.bf16.gmra.mrb[0].mxu0 %v148
    %v184 = vpop.f32.mrb[0].mxu0
    %v185 = vadd.f32 %v121, %v184
    %v186 = vpop.f32.mrb[0].mxu0
    %v187 = vadd.f32 %v125, %v186
    %v188 = vpop.f32.mrb[0].mxu0
    %v189 = vadd.f32 %v121, %v188
    %v190 = vpop.f32.mrb[0].mxu0
    %v191 = vadd.f32 %v125, %v190
    %192 = vdwg.mxu0
    %v193 = vmax.f32 %v185, 0.0
    %v194 = vmax.f32 %v187, 0.0
    %v195 = vmax.f32 %v189, 0.0
    %v196 = vmax.f32 %v191, 0.0
    %v197 = vpack.c.bf16 %v195, %v193
    %v198 = vpack.c.bf16 %v196, %v194
    %v199 = vld [vmem:[#allocation6] sm:$0xf]
    %v200 = vld [vmem:[#allocation6 + $0x4] sm:$0xf]
    %v201 = vld [vmem:[#allocation6 + $0x8] sm:$0xf]
    %v202 = vld [vmem:[#allocation6 + $0xc] sm:$0xf]
    %v203 = vld [vmem:[#allocation6 + $0x10] sm:$0xf]
    %v204 = vld [vmem:[#allocation6 + $0x14] sm:$0xf]
    %v205 = vld [vmem:[#allocation6 + $0x18] sm:$0xf]
    %v206 = vld [vmem:[#allocation6 + $0x1c] sm:$0xf]
    %v207 = vld [vmem:[#allocation6 + $0x20] sm:$0xf]
    %v208 = vld [vmem:[#allocation6 + $0x24] sm:$0xf]
    %v209 = vld [vmem:[#allocation6 + $0x28] sm:$0xf]
    %v210 = vld [vmem:[#allocation6 + $0x2c] sm:$0xf]
    %v211 = vld [vmem:[#allocation6 + $0x30] sm:$0xf]
    %v212 = vld [vmem:[#allocation6 + $0x34] sm:$0xf]
    %v213 = vld [vmem:[#allocation6 + $0x38] sm:$0xf]
    %v214 = vld [vmem:[#allocation6 + $0x3c] sm:$0xf]
    %v215 = vld [vmem:[#allocation6 + $0x40] sm:$0xf]
    %v216 = vld [vmem:[#allocation6 + $0x44] sm:$0xf]
    %v217 = vld [vmem:[#allocation6 + $0x48] sm:$0xf]
    %v218 = vld [vmem:[#allocation6 + $0x4c] sm:$0xf]
    %v219 = vld [vmem:[#allocation6 + $0x50] sm:$0xf]
    %v220 = vld [vmem:[#allocation6 + $0x54] sm:$0xf]
    %v221 = vld [vmem:[#allocation6 + $0x58] sm:$0xf]
    %v222 = vld [vmem:[#allocation6 + $0x5c] sm:$0xf]
    %v223 = vld [vmem:[#allocation6 + $0x60] sm:$0xf]
    %v224 = vld [vmem:[#allocation6 + $0x64] sm:$0xf]
    %v225 = vld [vmem:[#allocation6 + $0x68] sm:$0xf]
    %v226 = vld [vmem:[#allocation6 + $0x6c] sm:$0xf]
    %v227 = vld [vmem:[#allocation6 + $0x70] sm:$0xf]
    %v228 = vld [vmem:[#allocation6 + $0x74] sm:$0xf]
    %v229 = vld [vmem:[#allocation6 + $0x78] sm:$0xf]
    %v230 = vld [vmem:[#allocation6 + $0x7c] sm:$0xf]
    %v231 = vlaneseq
    %v232 = vshrl.u32 %v231, 7
    %v233 = vsub.s32 1, %v232
    %v234 = vrot.slane %v109, %v233
    %v267 = vunpack.c.l.b16 %v199
    %v268 = vunpack.c.l.b16 %v200
    %v269 = vunpack.c.l.b16 %v201
    %v270 = vunpack.c.l.b16 %v202
    %v271 = vunpack.c.l.b16 %v203
    %v272 = vunpack.c.l.b16 %v204
    %v273 = vunpack.c.l.b16 %v205
    %v274 = vunpack.c.l.b16 %v206
    %v275 = vunpack.c.l.b16 %v207
    %v276 = vunpack.c.l.b16 %v208
    %v277 = vunpack.c.l.b16 %v209
    %v278 = vunpack.c.l.b16 %v210
    %v279 = vunpack.c.l.b16 %v211
    %v280 = vunpack.c.l.b16 %v212
    %v281 = vunpack.c.l.b16 %v213
    %v282 = vunpack.c.l.b16 %v214
    %v283 = vunpack.c.l.b16 %v215
    %v284 = vunpack.c.l.b16 %v216
    %v285 = vunpack.c.l.b16 %v217
    %v286 = vunpack.c.l.b16 %v218
    %v287 = vunpack.c.l.b16 %v219
    %v288 = vunpack.c.l.b16 %v220
    %v289 = vunpack.c.l.b16 %v221
    %v290 = vunpack.c.l.b16 %v222
    %v291 = vunpack.c.l.b16 %v223
    %v292 = vunpack.c.l.b16 %v224
    %v293 = vunpack.c.l.b16 %v225
    %v294 = vunpack.c.l.b16 %v226
    %v295 = vunpack.c.l.b16 %v227
    %v296 = vunpack.c.l.b16 %v228
    %v297 = vunpack.c.l.b16 %v229
    %v298 = vunpack.c.l.b16 %v230
    %v299 = vpack.c.b16 %v268, %v267
    %v300 = vpack.c.b16 %v270, %v269
    %v301 = vpack.c.b16 %v272, %v271
    %v302 = vpack.c.b16 %v274, %v273
    %v303 = vpack.c.b16 %v276, %v275
    %v304 = vpack.c.b16 %v278, %v277
    %v305 = vpack.c.b16 %v280, %v279
    %v306 = vpack.c.b16 %v282, %v281
    %v307 = vpack.c.b16 %v284, %v283
    %v308 = vpack.c.b16 %v286, %v285
    %v309 = vpack.c.b16 %v288, %v287
    %v310 = vpack.c.b16 %v290, %v289
    %v311 = vpack.c.b16 %v292, %v291
    %v312 = vpack.c.b16 %v294, %v293
    %v313 = vpack.c.b16 %v296, %v295
    %v314 = vpack.c.b16 %v298, %v297
    %331 = vmatprep.subr.bf16.mxu0 0
    %332 = vmatpush1.bf16.msra.mxu0 %v299
    %333 = vmatprep.subr.bf16.mxu0 0
    %334 = vmatpush1.bf16.msra.mxu0 %v300
    %335 = vmatprep.subr.bf16.mxu0 0
    %336 = vmatpush1.bf16.msra.mxu0 %v301
    %337 = vmatprep.subr.bf16.mxu0 0
    %338 = vmatpush1.bf16.msra.mxu0 %v302
    %339 = vmatprep.subr.bf16.mxu0 0
    %340 = vmatpush1.bf16.msra.mxu0 %v303
    %341 = vmatprep.subr.bf16.mxu0 0
    %342 = vmatpush1.bf16.msra.mxu0 %v304
    %343 = vmatprep.subr.bf16.mxu0 0
    %344 = vmatpush1.bf16.msra.mxu0 %v305
    %345 = vmatprep.subr.bf16.mxu0 0
    %346 = vmatpush1.bf16.msra.mxu0 %v306
    %347 = vmatprep.subr.bf16.mxu0 0
    %348 = vmatpush1.bf16.msra.mxu0 %v307
    %349 = vmatprep.subr.bf16.mxu0 0
    %350 = vmatpush1.bf16.msra.mxu0 %v308
    %351 = vmatprep.subr.bf16.mxu0 0
    %352 = vmatpush1.bf16.msra.mxu0 %v309
    %353 = vmatprep.subr.bf16.mxu0 0
    %354 = vmatpush1.bf16.msra.mxu0 %v310
    %355 = vmatprep.subr.bf16.mxu0 0
    %356 = vmatpush1.bf16.msra.mxu0 %v311
    %357 = vmatprep.subr.bf16.mxu0 0
    %358 = vmatpush1.bf16.msra.mxu0 %v312
    %359 = vmatprep.subr.bf16.mxu0 0
    %360 = vmatpush1.bf16.msra.mxu0 %v313
    %361 = vmatprep.subr.bf16.mxu0 0
    %362 = vmatpush1.bf16.msra.mxu0 %v314
    %363 = vmatprep.mubr.bf16.mxu0 %v198
    %364 = vmatmul.mubr.bf16.gmra.mrb[0].mxu0 %v197
    %v365 = vpop.f32.mrb[0].mxu0
    %v366 = vadd.f32 %v234, %v365
    %v367 = vpop.f32.mrb[0].mxu0
    %v368 = vpop.f32.mrb[0].mxu0
    %v369 = vadd.f32 %v234, %v368
    %v370 = vpop.f32.mrb[0].mxu0
    %371 = vdwg.mxu0
    %v372 = vmax.f32 %v366, 0.0
    %v373 = vmax.f32 %v369, 0.0
    %v374 = vpack.c.bf16 %v373, %v372
    %v375 = vld [vmem:[#allocation7] sm:$0xf]
    %v376 = vld [vmem:[#allocation7 + $0x4] sm:$0xf]
    %v377 = vld [vmem:[#allocation7 + $0x8] sm:$0xf]
    %v378 = vld [vmem:[#allocation7 + $0xc] sm:$0xf]
    %v379 = vld [vmem:[#allocation7 + $0x10] sm:$0xf]
    %v380 = vld [vmem:[#allocation7 + $0x14] sm:$0xf]
    %v381 = vld [vmem:[#allocation7 + $0x18] sm:$0xf]
    %v382 = vld [vmem:[#allocation7 + $0x1c] sm:$0xf]
    %v383 = vld [vmem:[#allocation7 + $0x20] sm:$0xf]
    %v384 = vld [vmem:[#allocation7 + $0x24] sm:$0xf]
    %v385 = vld [vmem:[#allocation7 + $0x28] sm:$0xf]
    %v386 = vld [vmem:[#allocation7 + $0x2c] sm:$0xf]
    %v387 = vld [vmem:[#allocation7 + $0x30] sm:$0xf]
    %v388 = vld [vmem:[#allocation7 + $0x34] sm:$0xf]
    %v389 = vld [vmem:[#allocation7 + $0x38] sm:$0xf]
    %v390 = vld [vmem:[#allocation7 + $0x3c] sm:$0xf]
    %v391 = vlaneseq
    %v392 = vshrl.u32 %v391, 7
    %v393 = vsub.s32 2, %v392
    %v394 = vrot.slane %v109, %v393
    %v411 = vunpack.c.l.b16 %v375
    %v412 = vunpack.c.l.b16 %v376
    %v413 = vunpack.c.l.b16 %v377
    %v414 = vunpack.c.l.b16 %v378
    %v415 = vunpack.c.l.b16 %v379
    %v416 = vunpack.c.l.b16 %v380
    %v417 = vunpack.c.l.b16 %v381
    %v418 = vunpack.c.l.b16 %v382
    %v419 = vunpack.c.l.b16 %v383
    %v420 = vunpack.c.l.b16 %v384
    %v421 = vunpack.c.l.b16 %v385
    %v422 = vunpack.c.l.b16 %v386
    %v423 = vunpack.c.l.b16 %v387
    %v424 = vunpack.c.l.b16 %v388
    %v425 = vunpack.c.l.b16 %v389
    %v426 = vunpack.c.l.b16 %v390
    %v427 = vpack.c.b16 %v412, %v411
    %v428 = vpack.c.b16 %v414, %v413
    %v429 = vpack.c.b16 %v416, %v415
    %v430 = vpack.c.b16 %v418, %v417
    %v431 = vpack.c.b16 %v420, %v419
    %v432 = vpack.c.b16 %v422, %v421
    %v433 = vpack.c.b16 %v424, %v423
    %v434 = vpack.c.b16 %v426, %v425
    %443 = vmatprep.subr.bf16.mxu0 0
    %444 = vmatpush1.bf16.msra.mxu0 %v427
    %445 = vmatprep.subr.bf16.mxu0 0
    %446 = vmatpush1.bf16.msra.mxu0 %v428
    %447 = vmatprep.subr.bf16.mxu0 0
    %448 = vmatpush1.bf16.msra.mxu0 %v429
    %449 = vmatprep.subr.bf16.mxu0 0
    %450 = vmatpush1.bf16.msra.mxu0 %v430
    %451 = vmatprep.subr.bf16.mxu0 0
    %452 = vmatpush1.bf16.msra.mxu0 %v431
    %453 = vmatprep.subr.bf16.mxu0 0
    %454 = vmatpush1.bf16.msra.mxu0 %v432
    %455 = vmatprep.subr.bf16.mxu0 0
    %456 = vmatpush1.bf16.msra.mxu0 %v433
    %457 = vmatprep.subr.bf16.mxu0 0
    %458 = vmatpush1.bf16.msra.mxu0 %v434
    %459 = vmatprep.subr.bf16.mxu0 0
    %460 = vmatpush1.bf16.msra.mxu0 0
    %461 = vmatprep.subr.bf16.mxu0 0
    %462 = vmatpush1.bf16.msra.mxu0 0
    %463 = vmatprep.subr.bf16.mxu0 0
    %464 = vmatpush1.bf16.msra.mxu0 0
    %465 = vmatprep.subr.bf16.mxu0 0
    %466 = vmatpush1.bf16.msra.mxu0 0
    %467 = vmatprep.subr.bf16.mxu0 0
    %468 = vmatpush1.bf16.msra.mxu0 0
    %469 = vmatprep.subr.bf16.mxu0 0
    %470 = vmatpush1.bf16.msra.mxu0 0
    %471 = vmatprep.subr.bf16.mxu0 0
    %472 = vmatpush1.bf16.msra.mxu0 0
    %473 = vmatprep.subr.bf16.mxu0 0
    %474 = vmatpush1.bf16.msra.mxu0 0
    %475 = vmatprep.mubr.bf16.mxu0 0
    %476 = vmatmul.mubr.bf16.gmra.mrb[0].mxu0 %v374
    %v477 = vpop.f32.mrb[0].mxu0
    %v478 = vadd.f32 %v394, %v477
    %v479 = vpop.f32.mrb[0].mxu0
    %v480 = vpop.f32.mrb[0].mxu0
    %v481 = vadd.f32 %v394, %v480
    %v482 = vpop.f32.mrb[0].mxu0
    %483 = vdwg.mxu0
    %v484 = vmax.f32 %v478, 0.0
    %v485 = vmax.f32 %v481, 0.0
    %v486 = vpack.c.bf16 %v485, %v484
    %v487 = vld [vmem:[#allocation9] sm:$0xf]
    %v488 = vld [vmem:[#allocation9 + $0x4] sm:$0xf]
    %v489 = vld [vmem:[#allocation9 + $0x8] sm:$0xf]
    %v490 = vld [vmem:[#allocation9 + $0xc] sm:$0xf]
    %v491 = vld [vmem:[#allocation9 + $0x10] sm:$0xf]
    %v492 = vld [vmem:[#allocation9 + $0x14] sm:$0xf]
    %v493 = vld [vmem:[#allocation9 + $0x18] sm:$0xf]
    %v494 = vld [vmem:[#allocation9 + $0x1c] sm:$0xf]
    %v495 = vld [vmem:[#allocation9 + $0x20] sm:$0xf]
    %v496 = vld [vmem:[#allocation9 + $0x24] sm:$0xf]
    %v497 = vld [vmem:[#allocation9 + $0x28] sm:$0xf]
    %v498 = vld [vmem:[#allocation9 + $0x2c] sm:$0xf]
    %v499 = vld [vmem:[#allocation9 + $0x30] sm:$0xf]
    %v500 = vld [vmem:[#allocation9 + $0x34] sm:$0xf]
    %v501 = vld [vmem:[#allocation9 + $0x38] sm:$0xf]
    %v502 = vld [vmem:[#allocation9 + $0x3c] sm:$0xf]
    %v503 = vlaneseq
    %v504 = vshrl.u32 %v503, 7
    %v505 = vsub.s32 3, %v504
    %v506 = vrot.slane %v109, %v505
    %v523 = vunpack.c.l.b16 %v487
    %v524 = vunpack.c.l.b16 %v488
    %v525 = vunpack.c.l.b16 %v489
    %v526 = vunpack.c.l.b16 %v490
    %v527 = vunpack.c.l.b16 %v491
    %v528 = vunpack.c.l.b16 %v492
    %v529 = vunpack.c.l.b16 %v493
    %v530 = vunpack.c.l.b16 %v494
    %v531 = vunpack.c.l.b16 %v495
    %v532 = vunpack.c.l.b16 %v496
    %v533 = vunpack.c.l.b16 %v497
    %v534 = vunpack.c.l.b16 %v498
    %v535 = vunpack.c.l.b16 %v499
    %v536 = vunpack.c.l.b16 %v500
    %v537 = vunpack.c.l.b16 %v501
    %v538 = vunpack.c.l.b16 %v502
    %v539 = vpack.c.b16 %v524, %v523
    %v540 = vpack.c.b16 %v526, %v525
    %v541 = vpack.c.b16 %v528, %v527
    %v542 = vpack.c.b16 %v530, %v529
    %v543 = vpack.c.b16 %v532, %v531
    %v544 = vpack.c.b16 %v534, %v533
    %v545 = vpack.c.b16 %v536, %v535
    %v546 = vpack.c.b16 %v538, %v537
    %555 = vmatprep.subr.bf16.mxu0 0
    %556 = vmatpush1.bf16.msra.mxu0 %v539
    %557 = vmatprep.subr.bf16.mxu0 0
    %558 = vmatpush1.bf16.msra.mxu0 %v540
    %559 = vmatprep.subr.bf16.mxu0 0
    %560 = vmatpush1.bf16.msra.mxu0 %v541
    %561 = vmatprep.subr.bf16.mxu0 0
    %562 = vmatpush1.bf16.msra.mxu0 %v542
    %563 = vmatprep.subr.bf16.mxu0 0
    %564 = vmatpush1.bf16.msra.mxu0 %v543
    %565 = vmatprep.subr.bf16.mxu0 0
    %566 = vmatpush1.bf16.msra.mxu0 %v544
    %567 = vmatprep.subr.bf16.mxu0 0
    %568 = vmatpush1.bf16.msra.mxu0 %v545
    %569 = vmatprep.subr.bf16.mxu0 0
    %570 = vmatpush1.bf16.msra.mxu0 %v546
    %571 = vmatprep.subr.bf16.mxu0 0
    %572 = vmatpush1.bf16.msra.mxu0 0
    %573 = vmatprep.subr.bf16.mxu0 0
    %574 = vmatpush1.bf16.msra.mxu0 0
    %575 = vmatprep.subr.bf16.mxu0 0
    %576 = vmatpush1.bf16.msra.mxu0 0
    %577 = vmatprep.subr.bf16.mxu0 0
    %578 = vmatpush1.bf16.msra.mxu0 0
    %579 = vmatprep.subr.bf16.mxu0 0
    %580 = vmatpush1.bf16.msra.mxu0 0
    %581 = vmatprep.subr.bf16.mxu0 0
    %582 = vmatpush1.bf16.msra.mxu0 0
    %583 = vmatprep.subr.bf16.mxu0 0
    %584 = vmatpush1.bf16.msra.mxu0 0
    %585 = vmatprep.subr.bf16.mxu0 0
    %586 = vmatpush1.bf16.msra.mxu0 0
    %587 = vmatprep.mubr.bf16.mxu0 0
    %588 = vmatmul.mubr.bf16.gmra.mrb[0].mxu0 %v486
    %v589 = vpop.f32.mrb[0].mxu0
    %v590 = vadd.f32 %v506, %v589
    %v591 = vpop.f32.mrb[0].mxu0
    %v592 = vpop.f32.mrb[0].mxu0
    %v593 = vadd.f32 %v506, %v592
    %v594 = vpop.f32.mrb[0].mxu0
    %595 = vdwg.mxu0
    %v596 = vmax.f32 %v590, 0.0
    %v597 = vmax.f32 %v593, 0.0
    %v598 = vpack.c.bf16 %v597, %v596
    %v599 = vld [vmem:[#allocation10] sm:$0xf]
    %v600 = vld [vmem:[#allocation10 + $0x4] sm:$0xf]
    %v601 = vld [vmem:[#allocation10 + $0x8] sm:$0xf]
    %v602 = vld [vmem:[#allocation10 + $0xc] sm:$0xf]
    %v603 = vld [vmem:[#allocation10 + $0x10] sm:$0xf]
    %v604 = vld [vmem:[#allocation10 + $0x14] sm:$0xf]
    %v605 = vld [vmem:[#allocation10 + $0x18] sm:$0xf]
    %v606 = vld [vmem:[#allocation10 + $0x1c] sm:$0xf]
    %v607 = vld [vmem:[#allocation10 + $0x20] sm:$0xf]
    %v608 = vld [vmem:[#allocation10 + $0x24] sm:$0xf]
    %v609 = vld [vmem:[#allocation10 + $0x28] sm:$0xf]
    %v610 = vld [vmem:[#allocation10 + $0x2c] sm:$0xf]
    %v611 = vld [vmem:[#allocation10 + $0x30] sm:$0xf]
    %v612 = vld [vmem:[#allocation10 + $0x34] sm:$0xf]
    %v613 = vld [vmem:[#allocation10 + $0x38] sm:$0xf]
    %v614 = vld [vmem:[#allocation10 + $0x3c] sm:$0xf]
    %v615 = vlaneseq
    %v616 = vshrl.u32 %v615, 7
    %v617 = vsub.s32 4, %v616
    %v618 = vrot.slane %v109, %v617
    %v635 = vunpack.c.l.b16 %v599
    %v636 = vunpack.c.l.b16 %v600
    %v637 = vunpack.c.l.b16 %v601
    %v638 = vunpack.c.l.b16 %v602
    %v639 = vunpack.c.l.b16 %v603
    %v640 = vunpack.c.l.b16 %v604
    %v641 = vunpack.c.l.b16 %v605
    %v642 = vunpack.c.l.b16 %v606
    %v643 = vunpack.c.l.b16 %v607
    %v644 = vunpack.c.l.b16 %v608
    %v645 = vunpack.c.l.b16 %v609
    %v646 = vunpack.c.l.b16 %v610
    %v647 = vunpack.c.l.b16 %v611
    %v648 = vunpack.c.l.b16 %v612
    %v649 = vunpack.c.l.b16 %v613
    %v650 = vunpack.c.l.b16 %v614
    %v651 = vpack.c.b16 %v636, %v635
    %v652 = vpack.c.b16 %v638, %v637
    %v653 = vpack.c.b16 %v640, %v639
    %v654 = vpack.c.b16 %v642, %v641
    %v655 = vpack.c.b16 %v644, %v643
    %v656 = vpack.c.b16 %v646, %v645
    %v657 = vpack.c.b16 %v648, %v647
    %v658 = vpack.c.b16 %v650, %v649
    %667 = vmatprep.subr.bf16.mxu0 0
    %668 = vmatpush1.bf16.msra.mxu0 %v651
    %669 = vmatprep.subr.bf16.mxu0 0
    %670 = vmatpush1.bf16.msra.mxu0 %v652
    %671 = vmatprep.subr.bf16.mxu0 0
    %672 = vmatpush1.bf16.msra.mxu0 %v653
    %673 = vmatprep.subr.bf16.mxu0 0
    %674 = vmatpush1.bf16.msra.mxu0 %v654
    %675 = vmatprep.subr.bf16.mxu0 0
    %676 = vmatpush1.bf16.msra.mxu0 %v655
    %677 = vmatprep.subr.bf16.mxu0 0
    %678 = vmatpush1.bf16.msra.mxu0 %v656
    %679 = vmatprep.subr.bf16.mxu0 0
    %680 = vmatpush1.bf16.msra.mxu0 %v657
    %681 = vmatprep.subr.bf16.mxu0 0
    %682 = vmatpush1.bf16.msra.mxu0 %v658
    %683 = vmatprep.subr.bf16.mxu0 0
    %684 = vmatpush1.bf16.msra.mxu0 0
    %685 = vmatprep.subr.bf16.mxu0 0
    %686 = vmatpush1.bf16.msra.mxu0 0
    %687 = vmatprep.subr.bf16.mxu0 0
    %688 = vmatpush1.bf16.msra.mxu0 0
    %689 = vmatprep.subr.bf16.mxu0 0
    %690 = vmatpush1.bf16.msra.mxu0 0
    %691 = vmatprep.subr.bf16.mxu0 0
    %692 = vmatpush1.bf16.msra.mxu0 0
    %693 = vmatprep.subr.bf16.mxu0 0
    %694 = vmatpush1.bf16.msra.mxu0 0
    %695 = vmatprep.subr.bf16.mxu0 0
    %696 = vmatpush1.bf16.msra.mxu0 0
    %697 = vmatprep.subr.bf16.mxu0 0
    %698 = vmatpush1.bf16.msra.mxu0 0
    %699 = vmatprep.mubr.bf16.mxu0 0
    %700 = vmatmul.mubr.bf16.gmra.mrb[0].mxu0 %v598
    %v701 = vpop.f32.mrb[0].mxu0
    %v702 = vadd.f32 %v618, %v701
    %v703 = vpop.f32.mrb[0].mxu0
    %v704 = vpop.f32.mrb[0].mxu0
    %v705 = vadd.f32 %v618, %v704
    %v706 = vpop.f32.mrb[0].mxu0
    %707 = vdwg.mxu0
    %708 = vst [vmem:[%s7] sm:$0xff] %v702
    %709 = vst [vmem:[%s7 + $0x8] sm:$0xff] %v705
    // Predicated region
    $region54: #{regression_net_forward.1} parent=1 // pred_check
      _
    $region55: #{regression_net_forward.1} parent=1 // pred_check_branch
      %711 = sbr.rel (0) target = $region57
    $region56: #{regression_net_forward.1} parent=1 // pred_region
      _
    $region57: #{regression_net_forward.1} parent=1 // pred_fallthru
      _
    // Predicated region
    $region58: #{regression_net_forward.1} parent=1 // pred_check
      _
    $region59: #{regression_net_forward.1} parent=1 // pred_check_branch
      %713 = sbr.rel (0) target = $region61
    $region60: #{regression_net_forward.1} parent=1 // pred_region
      _
    $region61: #{regression_net_forward.1} parent=1 // pred_fallthru
      _
    %714 = vsyncpa [#allocation3], 1
    %715 = vsyncpa [#allocation5], 1
    %716 = vsyncpa [#allocation8], 1
    %717 = vsyncpa [#allocation11], 1

</llo_original>
